<compile_context>
chip_gen: v5e
topology: v5e:2x2
jax: 0.10.0
libtpu: 0.0.40
codegen_flags: <defaults>
</compile_context>

<pallas_src>
import functools

import jax
import jax.numpy as jnp
from jax.experimental import pallas as pl
from jax.experimental.pallas import tpu as pltpu

BN_EPS = 1e-5
MM_DTYPE = jnp.bfloat16       # matmul operand dtype (MXU accumulates in f32)
H1_STORE_DTYPE = jnp.bfloat16  # h1 HBM intermediate dtype (multi-tile path)
LANE = 128
SUBLANE_F32 = 8
SUBLANE_BF16 = 16
MAX_TB = 1024                 # batch tile rows / fused-path cutoff
STAT_ROWS = 8                 # per-core stats stored as an (8, f1p) slab
VMEM_CAP = 32 * 1024 * 1024   # never exceed (v7x has 64 MiB/TC total)


def _round_up(x, m):
    return ((x + m - 1) // m) * m


def _pad_to(x, shape):
    pads = [(0, t - s) for s, t in zip(x.shape, shape)]
    return jnp.pad(x, pads)


def _vmem_limit(nbytes):
    # 2x slack over the explicit-buffer estimate, floor 8 MiB, hard cap 32 MiB.
    return int(min(VMEM_CAP, max(8 * 1024 * 1024, 2 * nbytes)))


# --------------------------------------------------------------------------- #
# Fused single-launch kernel: fc1 + ReLU + BN(batch stats) + fc2 + ReLU + fc3  #
# --------------------------------------------------------------------------- #
def _critic_fused_kernel(xs_ref, w1_ref, b1_ref, w2_ref, b2_ref, w3_ref, b3_ref,
                         o_ref, *, batch, mm_dtype):
    h1 = jnp.dot(xs_ref[...].astype(mm_dtype), w1_ref[...],
                 preferred_element_type=jnp.float32) + b1_ref[...]
    h1 = jnp.maximum(h1, 0.0)

    rows = xs_ref.shape[0]
    if rows != batch:  # zero batch-padding rows so they don't pollute BN stats
        row = jax.lax.broadcasted_iota(jnp.int32, (rows, 1), 0)
        h1 = jnp.where(row < batch, h1, 0.0)

    inv_b = 1.0 / batch
    mean = jnp.sum(h1, axis=0, keepdims=True) * inv_b
    var = jnp.sum(h1 * h1, axis=0, keepdims=True) * inv_b - mean * mean
    inv_std = jax.lax.rsqrt(jnp.maximum(var, 0.0) + BN_EPS)
    h1n = (h1 - mean) * inv_std

    h2 = jnp.dot(h1n.astype(mm_dtype), w2_ref[...],
                 preferred_element_type=jnp.float32) + b2_ref[...]
    h2 = jnp.maximum(h2, 0.0)
    q = jnp.dot(h2.astype(mm_dtype), w3_ref[...],     # (rows, 128) lane-dense slab
                preferred_element_type=jnp.float32)
    o_ref[...] = q + b3_ref[0, 0]                     # b3 from SMEM scalar


# --------------------------------------------------------------------------- #
# Multi-tile pass 1: fc1 + ReLU + per-core BN partial stats, h1 stored bf16    #
# --------------------------------------------------------------------------- #
def _fc1_bn_stats_kernel(xs_ref, w1_ref, b1_ref, h1_ref, sum_ref, ssq_ref,
                         *, batch, tile_b, tiles_per_core, mask_rows, mm_dtype):
    c = pl.program_id(0)   # core (parallel on v7x megacore)
    t = pl.program_id(1)   # batch tile within core (arbitrary / resident stats)

    h1 = jnp.dot(xs_ref[...].astype(mm_dtype), w1_ref[...],
                 preferred_element_type=jnp.float32) + b1_ref[...]
    h1 = jnp.maximum(h1, 0.0)

    if mask_rows:
        row0 = (c * tiles_per_core + t) * tile_b
        row = row0 + jax.lax.broadcasted_iota(jnp.int32, (tile_b, 1), 0)
        h1 = jnp.where(row < batch, h1, 0.0)

    h1_ref[...] = h1.astype(h1_ref.dtype)   # bf16 writeback (stats stay f32)

    @pl.when(t == 0)
    def _():
        sum_ref[...] = jnp.zeros_like(sum_ref)
        ssq_ref[...] = jnp.zeros_like(ssq_ref)

    # Broadcast-accumulate partial/STAT_ROWS into all STAT_ROWS sublane rows;
    # a plain full-array sum in pass 2 then recovers the exact total (1/8 exact).
    scale = 1.0 / STAT_ROWS
    sum_ref[...] += jnp.sum(h1, axis=0, keepdims=True) * scale
    ssq_ref[...] += jnp.sum(h1 * h1, axis=0, keepdims=True) * scale


# --------------------------------------------------------------------------- #
# Multi-tile pass 2: combine stats + BN normalize + fc2 + ReLU + fc3           #
# --------------------------------------------------------------------------- #
def _bn_fc2_fc3_kernel(h1_ref, sum_ref, ssq_ref, w2_ref, b2_ref, w3_ref, b3_ref,
                       o_ref, *, batch, mm_dtype):
    inv_b = 1.0 / batch
    mean = jnp.sum(sum_ref[...], axis=0, keepdims=True) * inv_b
    var = jnp.sum(ssq_ref[...], axis=0, keepdims=True) * inv_b - mean * mean
    inv_std = jax.lax.rsqrt(jnp.maximum(var, 0.0) + BN_EPS)

    h1 = h1_ref[...].astype(jnp.float32)              # bf16 -> f32
    h1n = (h1 - mean) * inv_std

    h2 = jnp.dot(h1n.astype(mm_dtype), w2_ref[...],
                 preferred_element_type=jnp.float32) + b2_ref[...]
    h2 = jnp.maximum(h2, 0.0)
    q = jnp.dot(h2.astype(mm_dtype), w3_ref[...],     # (TB, 128) lane-dense slab
                preferred_element_type=jnp.float32)
    o_ref[...] = q + b3_ref[0, 0]


# --------------------------------------------------------------------------- #
# Wrapper                                                                      #
# --------------------------------------------------------------------------- #
def critic_forward(state, action, kparams, max_tb=MAX_TB):
    """state [B, input_dim], action [B, action_size] -> Q-values [B, 1]."""
    if state.ndim == 1:
        state = state[None, :]
    if action.ndim == 1:
        action = action[None, :]
    state = state.astype(jnp.float32)
    action = action.astype(jnp.float32)        # mirrors action.float()

    xs = jnp.concatenate([state, action], axis=1)   # tiny one-time [B, 20] concat
    B, in1 = xs.shape
    w1, b1 = kparams["w1"], kparams["b1"]
    w2, b2 = kparams["w2"], kparams["b2"]
    w3, b3 = kparams["w3"], kparams["b3"]
    f1p = w1.shape[1]
    f2p = w2.shape[1]

    b_fused = _round_up(B, SUBLANE_F32)

    # ------------------------- fused single-launch path ----------------------
    if b_fused <= max_tb:
        b_pad = b_fused
        if b_pad != B:
            xs = jnp.pad(xs, ((0, b_pad - B), (0, 0)))

        wbytes = 2 * (in1 * f1p + f1p * f2p + f2p * LANE) + 4 * (f1p + f2p)
        act_bytes = 4 * b_pad * (in1 + 4 * f1p + f2p + LANE)
        fused = pl.pallas_call(
            functools.partial(_critic_fused_kernel, batch=B, mm_dtype=MM_DTYPE),
            grid=(1,),
            in_specs=[
                pl.BlockSpec((b_pad, in1), lambda i: (0, 0)),
                pl.BlockSpec((in1, f1p), lambda i: (0, 0)),
                pl.BlockSpec((1, f1p), lambda i: (0, 0)),
                pl.BlockSpec((f1p, f2p), lambda i: (0, 0)),
                pl.BlockSpec((1, f2p), lambda i: (0, 0)),
                pl.BlockSpec((f2p, LANE), lambda i: (0, 0)),
                pl.BlockSpec(memory_space=pltpu.MemorySpace.SMEM),   # b3 scalar
            ],
            out_specs=pl.BlockSpec((b_pad, LANE), lambda i: (0, 0)),
            out_shape=jax.ShapeDtypeStruct((b_pad, LANE), jnp.float32),
            compiler_params=pltpu.CompilerParams(
                dimension_semantics=("arbitrary",),
                vmem_limit_bytes=_vmem_limit(wbytes + act_bytes)),
            cost_estimate=pl.CostEstimate(
                flops=2 * b_pad * (in1 * f1p + f1p * f2p + f2p * LANE),
                transcendentals=f1p,
                bytes_accessed=4 * b_pad * (in1 + LANE) + wbytes),
        )
        out = fused(xs, w1, b1, w2, b2, w3, b3)
        return out[:B, 0:1]

    # ------------------------------ multi-tile path ---------------------------
    assert max_tb % SUBLANE_BF16 == 0, "tile must meet bf16 (16,128) tiling"
    tb = max_tb
    cores = 2                                     # v7x megacore; loop on v5e/v6e
    n_tiles = (B + tb - 1) // tb
    tiles_per_core = (n_tiles + cores - 1) // cores
    b_pad = cores * tiles_per_core * tb
    if b_pad != B:
        xs = jnp.pad(xs, ((0, b_pad - B), (0, 0)))
    mask_rows = b_pad != B
    stat_rows = cores * STAT_ROWS

    # --- pass 1: fc1 + ReLU, per-core BN partial stats, bf16 h1 writeback -----
    p1_bytes = (2 * (tb * in1 * 4 + tb * f1p * 2 + 2 * STAT_ROWS * f1p * 4)
                + 2 * (in1 * f1p * 2 + f1p * 4)
                + 3 * tb * f1p * 4)                 # f32 in-kernel intermediates
    pass1 = pl.pallas_call(
        functools.partial(_fc1_bn_stats_kernel, batch=B, tile_b=tb,
                          tiles_per_core=tiles_per_core, mask_rows=mask_rows,
                          mm_dtype=MM_DTYPE),
        grid=(cores, tiles_per_core),
        in_specs=[
            pl.BlockSpec((tb, in1), lambda c, t: (c * tiles_per_core + t, 0)),
            pl.BlockSpec((in1, f1p), lambda c, t: (0, 0)),   # weights resident
            pl.BlockSpec((1, f1p), lambda c, t: (0, 0)),
        ],
        out_specs=[
            pl.BlockSpec((tb, f1p), lambda c, t: (c * tiles_per_core + t, 0)),
            pl.BlockSpec((STAT_ROWS, f1p), lambda c, t: (c, 0)),  # per-core stats
            pl.BlockSpec((STAT_ROWS, f1p), lambda c, t: (c, 0)),
        ],
        out_shape=[
            jax.ShapeDtypeStruct((b_pad, f1p), H1_STORE_DTYPE),
            jax.ShapeDtypeStruct((stat_rows, f1p), jnp.float32),
            jax.ShapeDtypeStruct((stat_rows, f1p), jnp.float32),
        ],
        compiler_params=pltpu.CompilerParams(
            dimension_semantics=("parallel", "arbitrary"),
            vmem_limit_bytes=_vmem_limit(p1_bytes)),
        cost_estimate=pl.CostEstimate(
            flops=2 * b_pad * in1 * f1p,
            transcendentals=0,
            bytes_accessed=4 * b_pad * in1 + 2 * b_pad * f1p),
    )
    h1, bn_sum, bn_ssq = pass1(xs, w1, b1)

    # --- pass 2: combine stats, normalize, fc2 + ReLU, fc3 (fully parallel) ---
    n_out_tiles = b_pad // tb
    p2_bytes = (2 * (tb * f1p * 2 + tb * LANE * 4)
                + 2 * stat_rows * f1p * 4 * 2
                + (f1p * f2p * 2 + f2p * LANE * 2 + (f1p + f2p) * 4)
                + 3 * tb * f1p * 4)
    pass2 = pl.pallas_call(
        functools.partial(_bn_fc2_fc3_kernel, batch=B, mm_dtype=MM_DTYPE),
        grid=(n_out_tiles,),
        in_specs=[
            pl.BlockSpec((tb, f1p), lambda i: (i, 0)),
            pl.BlockSpec((stat_rows, f1p), lambda i: (0, 0)),
            pl.BlockSpec((stat_rows, f1p), lambda i: (0, 0)),
            pl.BlockSpec((f1p, f2p), lambda i: (0, 0)),
            pl.BlockSpec((1, f2p), lambda i: (0, 0)),
            pl.BlockSpec((f2p, LANE), lambda i: (0, 0)),
            pl.BlockSpec(memory_space=pltpu.MemorySpace.SMEM),   # b3 scalar
        ],
        out_specs=pl.BlockSpec((tb, LANE), lambda i: (i, 0)),
        out_shape=jax.ShapeDtypeStruct((b_pad, LANE), jnp.float32),
        compiler_params=pltpu.CompilerParams(
            dimension_semantics=("parallel",),      # megacore sharding
            vmem_limit_bytes=_vmem_limit(p2_bytes)),
        cost_estimate=pl.CostEstimate(
            flops=2 * b_pad * (f1p * f2p + f2p * LANE),
            transcendentals=f1p,
            bytes_accessed=2 * b_pad * f1p + 4 * b_pad * LANE),
    )
    out = pass2(h1, bn_sum, bn_ssq, w2, b2, w3, b3)
    return out[:B, 0:1]   # Q-values live in lane 0 of the lane-dense slab


# --------------------------------------------------------------------------- #
# Parameter construction                                                       #
# --------------------------------------------------------------------------- #
def init_params(key, input_dim, action_size, fcs1_units, fc2_units):
    """Deterministic init mimicking the module's reset_parameters().
    Weights stored pre-transposed as [in_features, out_features]."""
    k1, k2, k3, kb1, kb2, kb3 = jax.random.split(key, 6)
    in1 = input_dim + action_size

    # hidden_init uses weight.size()[0] == out_features (quirk of the reference).
    lim1 = 1.0 / jnp.sqrt(jnp.float32(fcs1_units))
    lim2 = 1.0 / jnp.sqrt(jnp.float32(fc2_units))

    w1 = jax.random.uniform(k1, (in1, fcs1_units), jnp.float32, -lim1, lim1)
    w2 = jax.random.uniform(k2, (fcs1_units, fc2_units), jnp.float32, -lim2, lim2)
    w3 = jax.random.uniform(k3, (fc2_units, 1), jnp.float32, -3e-3, 3e-3)

    # PyTorch default Linear bias init: U(-1/sqrt(fan_in), 1/sqrt(fan_in)).
    bl1 = 1.0 / jnp.sqrt(jnp.float32(in1))
    bl2 = 1.0 / jnp.sqrt(jnp.float32(fcs1_units))
    bl3 = 1.0 / jnp.sqrt(jnp.float32(fc2_units))
    b1 = jax.random.uniform(kb1, (1, fcs1_units), jnp.float32, -bl1, bl1)
    b2 = jax.random.uniform(kb2, (1, fc2_units), jnp.float32, -bl2, bl2)
    b3 = jax.random.uniform(kb3, (1, 1), jnp.float32, -bl3, bl3)

    return (w1, b1, w2, b2, w3, b3)


def prepare_params(params, mm_dtype=MM_DTYPE):
    """Pad feature dims to 128 lanes, cast matmul weights to bf16.
    Biases stay f32; b3 becomes a (1,1) SMEM scalar."""
    w1, b1, w2, b2, w3, b3 = params
    in1 = w1.shape[0]
    f1p = _round_up(w1.shape[1], LANE)
    f2p = _round_up(w2.shape[1], LANE)
    return dict(
        w1=_pad_to(w1.astype(mm_dtype), (in1, f1p)),
        b1=_pad_to(b1.astype(jnp.float32), (1, f1p)),
        w2=_pad_to(w2.astype(mm_dtype), (f1p, f2p)),
        b2=_pad_to(b2.astype(jnp.float32), (1, f2p)),
        w3=_pad_to(w3.astype(mm_dtype), (f2p, LANE)),   # real column in lane 0
        b3=b3.astype(jnp.float32).reshape(1, 1),
    )


# --------------------------------------------------------------------------- #
# Pure-JAX reference (same numerics: bf16 matmul operands, f32 accum,          #
# training-mode BatchNorm with clamped biased batch variance)                  #
# --------------------------------------------------------------------------- #
def critic_reference(state, action, params, mm_dtype=MM_DTYPE, h1_store_dtype=None):
    w1, b1, w2, b2, w3, b3 = params
    xs = jnp.concatenate([state.astype(jnp.float32), action.astype(jnp.float32)],
                         axis=1)
    h1 = jnp.dot(xs.astype(mm_dtype), w1.astype(mm_dtype),
                 preferred_element_type=jnp.float32) + b1
    h1 = jnp.maximum(h1, 0.0)
    mean = jnp.mean(h1, axis=0, keepdims=True)
    var = jnp.mean(h1 * h1, axis=0, keepdims=True) - mean * mean
    inv_std = jax.lax.rsqrt(jnp.maximum(var, 0.0) + BN_EPS)
    if h1_store_dtype is not None:              # mirror bf16 h1 HBM intermediate
        h1 = h1.astype(h1_store_dtype).astype(jnp.float32)
    h1n = (h1 - mean) * inv_std
    h2 = jnp.dot(h1n.astype(mm_dtype), w2.astype(mm_dtype),
                 preferred_element_type=jnp.float32) + b2
    h2 = jnp.maximum(h2, 0.0)
    return jnp.dot(h2.astype(mm_dtype), w3.astype(mm_dtype),
                   preferred_element_type=jnp.float32) + b3


if __name__ == "__main__":
    B = 8
    INPUT_DIM = 16
    ACTION_SIZE = 4
    FCS1_UNITS = 32
    FC2_UNITS = 32

    key = jax.random.PRNGKey(0)
    kp, ks, ka, ks2, ka2 = jax.random.split(key, 5)

    params = init_params(kp, INPUT_DIM, ACTION_SIZE, FCS1_UNITS, FC2_UNITS)
    kparams = prepare_params(params)

    # --- fused single-launch path (whole batch in one tile) -------------------
    state = jax.random.normal(ks, (B, INPUT_DIM), jnp.float32)
    action = jax.random.uniform(ka, (B, ACTION_SIZE), jnp.float32, -1.0, 1.0)

    q = critic_forward(state, action, kparams)
    q = jax.block_until_ready(q)
    q_ref = critic_reference(state, action, params)
    assert q.shape == (B, 1)
    err = float(jnp.max(jnp.abs(q - q_ref)))
    assert jnp.allclose(q, q_ref, atol=2e-5, rtol=1e-3), f"fused max abs err {err}"

    # --- multi-tile path (forced tiny tile to exercise both passes) -----------
    B2 = 48
    state2 = jax.random.normal(ks2, (B2, INPUT_DIM), jnp.float32)
    action2 = jax.random.uniform(ka2, (B2, ACTION_SIZE), jnp.float32, -1.0, 1.0)

    q2 = critic_forward(state2, action2, kparams, max_tb=16)
    q2 = jax.block_until_ready(q2)
    q2_ref = critic_reference(state2, action2, params, h1_store_dtype=H1_STORE_DTYPE)
    assert q2.shape == (B2, 1)
    err2 = float(jnp.max(jnp.abs(q2 - q2_ref)))
    assert jnp.allclose(q2, q2_ref, atol=1e-3, rtol=1e-2), \
        f"multi-tile max abs err {err2}"

    print("KERNEL_OK")
</pallas_src>

<mosaic_0001>
module attributes {stable_mosaic.version = 11 : i64} {
  func.func @_critic_fused_kernel(%arg0: i32, %arg1: memref<8x20xf32, #tpu.memory_space<vmem>>, %arg2: memref<20x128xbf16, #tpu.memory_space<vmem>>, %arg3: memref<1x128xf32, #tpu.memory_space<vmem>>, %arg4: memref<128x128xbf16, #tpu.memory_space<vmem>>, %arg5: memref<1x128xf32, #tpu.memory_space<vmem>>, %arg6: memref<128x128xbf16, #tpu.memory_space<vmem>>, %arg7: memref<1x1xf32, #tpu.memory_space<smem>>, %arg8: memref<8x128xf32, #tpu.memory_space<vmem>>) attributes {dimension_semantics = [#tpu.dimension_semantics<arbitrary>], iteration_bounds = array<i64: 1>, scalar_prefetch = 0 : i64, scratch_operands = 0 : i64, tpu.core_type = #tpu.core_type<tc>, window_params = [{pipeline_mode = #tpu.pipeline_mode<synchronous>, transform_indices = @transform_0, window_bounds = array<i64: 8, 20>}, {pipeline_mode = #tpu.pipeline_mode<synchronous>, transform_indices = @transform_1, window_bounds = array<i64: 20, 128>}, {pipeline_mode = #tpu.pipeline_mode<synchronous>, transform_indices = @transform_2, window_bounds = array<i64: 1, 128>}, {pipeline_mode = #tpu.pipeline_mode<synchronous>, transform_indices = @transform_3, window_bounds = array<i64: 128, 128>}, {pipeline_mode = #tpu.pipeline_mode<synchronous>, transform_indices = @transform_4, window_bounds = array<i64: 1, 128>}, {pipeline_mode = #tpu.pipeline_mode<synchronous>, transform_indices = @transform_5, window_bounds = array<i64: 128, 128>}, {transform_indices = @transform_6, window_bounds = array<i64: 1, 1>}, {pipeline_mode = #tpu.pipeline_mode<synchronous>, transform_indices = @transform_7, window_bounds = array<i64: 8, 128>}]} {
    %c0 = arith.constant 0 : index
    %c0_0 = arith.constant 0 : index
    %0 = vector.load %arg1[%c0, %c0_0] : memref<8x20xf32, #tpu.memory_space<vmem>>, vector<8x20xf32>
    %1 = arith.truncf %0 : vector<8x20xf32> to vector<8x20xbf16>
    %c0_1 = arith.constant 0 : index
    %c0_2 = arith.constant 0 : index
    %2 = vector.load %arg2[%c0_1, %c0_2] : memref<20x128xbf16, #tpu.memory_space<vmem>>, vector<20x128xbf16>
    %cst = arith.constant dense<0.000000e+00> : vector<8x128xf32>
    %3 = tpu.matmul %1, %2, %cst {dimension_numbers = #tpu.dot_dimension_numbers<[1], [0], [0], [1], [0, 0, 1, 1], [], []>} : vector<8x20xbf16>, vector<20x128xbf16>, vector<8x128xf32> -> vector<8x128xf32>
    %c0_3 = arith.constant 0 : index
    %c0_4 = arith.constant 0 : index
    %4 = vector.load %arg3[%c0_3, %c0_4] : memref<1x128xf32, #tpu.memory_space<vmem>>, vector<1x128xf32>
    %5 = vector.broadcast %4 : vector<1x128xf32> to vector<8x128xf32>
    %6 = arith.addf %3, %5 : vector<8x128xf32>
    %cst_5 = arith.constant 0.000000e+00 : f32
    %7 = vector.broadcast %cst_5 : f32 to vector<8x128xf32>
    %8 = arith.maximumf %6, %7 : vector<8x128xf32>
    %cst_6 = arith.constant dense<0.000000e+00> : vector<128xf32>
    %9 = vector.multi_reduction <add>, %8, %cst_6 [0] : vector<8x128xf32> to vector<128xf32>
    %10 = vector.shape_cast %9 : vector<128xf32> to vector<1x128xf32>
    %cst_7 = arith.constant 1.250000e-01 : f32
    %11 = vector.broadcast %cst_7 : f32 to vector<1x128xf32>
    %12 = arith.mulf %10, %11 : vector<1x128xf32>
    %13 = arith.mulf %8, %8 : vector<8x128xf32>
    %cst_8 = arith.constant dense<0.000000e+00> : vector<128xf32>
    %14 = vector.multi_reduction <add>, %13, %cst_8 [0] : vector<8x128xf32> to vector<128xf32>
    %15 = vector.shape_cast %14 : vector<128xf32> to vector<1x128xf32>
    %cst_9 = arith.constant 1.250000e-01 : f32
    %16 = vector.broadcast %cst_9 : f32 to vector<1x128xf32>
    %17 = arith.mulf %15, %16 : vector<1x128xf32>
    %18 = arith.mulf %12, %12 : vector<1x128xf32>
    %19 = arith.subf %17, %18 : vector<1x128xf32>
    %cst_10 = arith.constant 0.000000e+00 : f32
    %20 = vector.broadcast %cst_10 : f32 to vector<1x128xf32>
    %21 = arith.maximumf %19, %20 : vector<1x128xf32>
    %cst_11 = arith.constant 9.99999974E-6 : f32
    %22 = vector.broadcast %cst_11 : f32 to vector<1x128xf32>
    %23 = arith.addf %21, %22 : vector<1x128xf32>
    %24 = math.rsqrt %23 : vector<1x128xf32>
    %25 = vector.broadcast %12 : vector<1x128xf32> to vector<8x128xf32>
    %26 = arith.subf %8, %25 : vector<8x128xf32>
    %27 = vector.broadcast %24 : vector<1x128xf32> to vector<8x128xf32>
    %28 = arith.mulf %26, %27 : vector<8x128xf32>
    %29 = arith.truncf %28 : vector<8x128xf32> to vector<8x128xbf16>
    %c0_12 = arith.constant 0 : index
    %c0_13 = arith.constant 0 : index
    %30 = vector.load %arg4[%c0_12, %c0_13] : memref<128x128xbf16, #tpu.memory_space<vmem>>, vector<128x128xbf16>
    %cst_14 = arith.constant dense<0.000000e+00> : vector<8x128xf32>
    %31 = tpu.matmul %29, %30, %cst_14 {dimension_numbers = #tpu.dot_dimension_numbers<[1], [0], [0], [1], [0, 0, 1, 1], [], []>} : vector<8x128xbf16>, vector<128x128xbf16>, vector<8x128xf32> -> vector<8x128xf32>
    %c0_15 = arith.constant 0 : index
    %c0_16 = arith.constant 0 : index
    %32 = vector.load %arg5[%c0_15, %c0_16] : memref<1x128xf32, #tpu.memory_space<vmem>>, vector<1x128xf32>
    %33 = vector.broadcast %32 : vector<1x128xf32> to vector<8x128xf32>
    %34 = arith.addf %31, %33 : vector<8x128xf32>
    %cst_17 = arith.constant 0.000000e+00 : f32
    %35 = vector.broadcast %cst_17 : f32 to vector<8x128xf32>
    %36 = arith.maximumf %34, %35 : vector<8x128xf32>
    %37 = arith.truncf %36 : vector<8x128xf32> to vector<8x128xbf16>
    %c0_18 = arith.constant 0 : index
    %c0_19 = arith.constant 0 : index
    %38 = vector.load %arg6[%c0_18, %c0_19] : memref<128x128xbf16, #tpu.memory_space<vmem>>, vector<128x128xbf16>
    %cst_20 = arith.constant dense<0.000000e+00> : vector<8x128xf32>
    %39 = tpu.matmul %37, %38, %cst_20 {dimension_numbers = #tpu.dot_dimension_numbers<[1], [0], [0], [1], [0, 0, 1, 1], [], []>} : vector<8x128xbf16>, vector<128x128xbf16>, vector<8x128xf32> -> vector<8x128xf32>
    %c0_21 = arith.constant 0 : index
    %c0_22 = arith.constant 0 : index
    %40 = memref.load %arg7[%c0_21, %c0_22] : memref<1x1xf32, #tpu.memory_space<smem>>
    %41 = vector.broadcast %40 : f32 to vector<8x128xf32>
    %42 = arith.addf %39, %41 : vector<8x128xf32>
    %c0_23 = arith.constant 0 : index
    %c0_24 = arith.constant 0 : index
    %43 = vector.load %arg8[%c0_23, %c0_24] : memref<8x128xf32, #tpu.memory_space<vmem>>, vector<8x128xf32>
    tpu.vector_store %arg8[%c0_23, %c0_24], %42 {strides = array<i32>} : memref<8x128xf32, #tpu.memory_space<vmem>>, vector<8x128xf32>,
    return
  }
  func.func @transform_0(%arg0: i32) -> (i32, i32) {
    %c0_i32 = arith.constant 0 : i32
    %c0_i32_0 = arith.constant 0 : i32
    %c0_i32_1 = arith.constant 0 : i32
    return %c0_i32, %c0_i32_0 : i32, i32
  }
  func.func @transform_1(%arg0: i32) -> (i32, i32) {
    %c0_i32 = arith.constant 0 : i32
    %c0_i32_0 = arith.constant 0 : i32
    %c0_i32_1 = arith.constant 0 : i32
    return %c0_i32, %c0_i32_0 : i32, i32
  }
  func.func @transform_2(%arg0: i32) -> (i32, i32) {
    %c0_i32 = arith.constant 0 : i32
    %c0_i32_0 = arith.constant 0 : i32
    %c0_i32_1 = arith.constant 0 : i32
    return %c0_i32, %c0_i32_0 : i32, i32
  }
  func.func @transform_3(%arg0: i32) -> (i32, i32) {
    %c0_i32 = arith.constant 0 : i32
    %c0_i32_0 = arith.constant 0 : i32
    %c0_i32_1 = arith.constant 0 : i32
    return %c0_i32, %c0_i32_0 : i32, i32
  }
  func.func @transform_4(%arg0: i32) -> (i32, i32) {
    %c0_i32 = arith.constant 0 : i32
    %c0_i32_0 = arith.constant 0 : i32
    %c0_i32_1 = arith.constant 0 : i32
    return %c0_i32, %c0_i32_0 : i32, i32
  }
  func.func @transform_5(%arg0: i32) -> (i32, i32) {
    %c0_i32 = arith.constant 0 : i32
    %c0_i32_0 = arith.constant 0 : i32
    %c0_i32_1 = arith.constant 0 : i32
    return %c0_i32, %c0_i32_0 : i32, i32
  }
  func.func @transform_6(%arg0: i32) -> (i32, i32) {
    %c0_i32 = arith.constant 0 : i32
    %c0_i32_0 = arith.constant 0 : i32
    %c0_i32_1 = arith.constant 0 : i32
    return %c0_i32, %c0_i32_0 : i32, i32
  }
  func.func @transform_7(%arg0: i32) -> (i32, i32) {
    %c0_i32 = arith.constant 0 : i32
    %c0_i32_0 = arith.constant 0 : i32
    %c0_i32_1 = arith.constant 0 : i32
    return %c0_i32, %c0_i32_0 : i32, i32
  }
}

</mosaic_0001>

<llo_original>
// kernel: tpu_custom_call.1
$region0: #{tpu_custom_call.1}
  #allocation0 [shape = 'u32[]', space=smem, size = 0x4, offset = 0x4, fixed_abs, tag = 'smem constant byte address 0x4 - core index']
  #allocation1 [shape = 'u32[72,128]{1,0:T(1,128)}', space=vmem, size = 0x9000, scoped, tag = 'internal scratch']
  #allocation2 [shape = 'f32[1,1]{1,0:T(1,128)S(6)}', space=smem, size = 0x200, scoped, tag = 'scoped memory for tpu_custom_call.1']
  %s0 = inlined_call_operand.hbm [shape: f32[8,20], index: 0, kind: input, shape index: {}]
  %s1 = inlined_call_operand.hbm [shape: bf16[20,128], index: 1, kind: input, shape index: {}]
  %s2 = inlined_call_operand.vmem [shape: f32[1,128], index: 2, kind: input, shape index: {}]
  %s3 = inlined_call_operand.hbm [shape: bf16[128,128], index: 3, kind: input, shape index: {}]
  %s4 = inlined_call_operand.vmem [shape: f32[1,128], index: 4, kind: input, shape index: {}]
  %s5 = inlined_call_operand.hbm [shape: bf16[128,128], index: 5, kind: input, shape index: {}]
  %s6 = inlined_call_operand.<no memory space> [shape: f32[1,1], index: 6, kind: input, shape index: {}]
  %s7 = inlined_call_operand.hbm [shape: f32[8,128], index: 7, kind: output, shape index: {}]
  %s8 = sld [smem:[#allocation0]]
  $region54: #{tpu_custom_call.1} parent=0
    _
  %s10 = ssub.s32 1, %s8
  %s11 = scalar_select 0, %s10, %s8
  %12 = sst [smem:[#allocation2]] %s6
  $region1: #{tpu_custom_call.1} parent=0
    #allocation3 [shape = 'u8[4096]{0}', space=vmem, size = 0x1000, scoped, tag = 'input window, operand 0, single buffered']
    #allocation4 [shape = 's32[1]{0}', space=sflag, size = 0x4, scoped, tag = 'scoped memory for tpu_custom_call.1']
    #allocation5 [shape = 's32[1]{0}', space=sflag, size = 0x4, scoped, tag = 'scoped memory for tpu_custom_call.1']
    #allocation6 [shape = 'u8[6144]{0}', space=vmem, size = 0x1800, scoped, tag = 'input window, operand 1, single buffered']
    #allocation7 [shape = 's32[1]{0}', space=sflag, size = 0x4, scoped, tag = 'scoped memory for tpu_custom_call.1']
    #allocation8 [shape = 'u8[32768]{0}', space=vmem, size = 0x8000, scoped, tag = 'input window, operand 3, single buffered']
    #allocation9 [shape = 'u8[32768]{0}', space=vmem, size = 0x8000, scoped, tag = 'input window, operand 5, single buffered']
    #allocation10 [shape = 's32[1]{0}', space=sflag, size = 0x4, scoped, tag = 'scoped memory for tpu_custom_call.1']
    #allocation11 [shape = 'u8[4096]{0}', space=vmem, size = 0x1000, scoped, tag = 'output window, operand 0, single buffered']
    %13 = vsyncpa [#allocation4], 0
    %14 = vsyncpa [#allocation7], 0
    %15 = vsyncpa [#allocation10], 0
    %16 = vsyncpa [#allocation5], 0
    // Predicated region
    $region2: #{tpu_custom_call.1} parent=1 // pred_check
      _
    $region3: #{tpu_custom_call.1} parent=1 // pred_check_branch
      %18 = sbr.rel (0) target = $region5
    $region4: #{tpu_custom_call.1} parent=1 // pred_region
      %20 = vsyncadd [#allocation4], 0
      %s22 = sshll.u32 %s0, 4
      %s23 = int_to_ptr.hbm [resolvable:$true] %s22
      %s24 = sshll.u32 [#allocation3], 4
      %s25 = int_to_ptr.vmem [resolvable:$true] %s24
      %27 = dma.hbm_to_vmem [thread:$0]  %s23, 128, %s25, [#allocation4]
    $region5: #{tpu_custom_call.1} parent=1 // pred_fallthru
      _
    // Predicated region
    $region6: #{tpu_custom_call.1} parent=1 // pred_check
      _
    $region7: #{tpu_custom_call.1} parent=1 // pred_check_branch
      %29 = sbr.rel (0) target = $region9
    $region8: #{tpu_custom_call.1} parent=1 // pred_region
      %31 = vsyncadd [#allocation7], 0
      %s32 = sshll.u32 %s1, 4
      %s33 = int_to_ptr.hbm [resolvable:$true] %s32
      %s34 = sshll.u32 [#allocation6], 4
      %s35 = int_to_ptr.vmem [resolvable:$true] %s34
      %40 = dma.hbm_to_vmem [thread:$0]  %s33, 192, %s35, [#allocation7], 64, 64, 4
    $region9: #{tpu_custom_call.1} parent=1 // pred_fallthru
      _
    // Predicated region
    $region10: #{tpu_custom_call.1} parent=1 // pred_check
      _
    $region11: #{tpu_custom_call.1} parent=1 // pred_check_branch
      %42 = sbr.rel (0) target = $region13
    $region12: #{tpu_custom_call.1} parent=1 // pred_region
      _
    $region13: #{tpu_custom_call.1} parent=1 // pred_fallthru
      _
    // Predicated region
    $region14: #{tpu_custom_call.1} parent=1 // pred_check
      _
    $region15: #{tpu_custom_call.1} parent=1 // pred_check_branch
      %44 = sbr.rel (0) target = $region17
    $region16: #{tpu_custom_call.1} parent=1 // pred_region
      %46 = vsyncadd [#allocation7], 0
      %s47 = sshll.u32 %s3, 4
      %s48 = int_to_ptr.hbm [resolvable:$true] %s47
      %s49 = sshll.u32 [#allocation8], 4
      %s50 = int_to_ptr.vmem [resolvable:$true] %s49
      %55 = dma.hbm_to_vmem [thread:$0]  %s48, 1024, %s50, [#allocation7], 64, 64, 4
    $region17: #{tpu_custom_call.1} parent=1 // pred_fallthru
      _
    // Predicated region
    $region18: #{tpu_custom_call.1} parent=1 // pred_check
      _
    $region19: #{tpu_custom_call.1} parent=1 // pred_check_branch
      %57 = sbr.rel (0) target = $region21
    $region20: #{tpu_custom_call.1} parent=1 // pred_region
      _
    $region21: #{tpu_custom_call.1} parent=1 // pred_fallthru
      _
    // Predicated region
    $region22: #{tpu_custom_call.1} parent=1 // pred_check
      _
    $region23: #{tpu_custom_call.1} parent=1 // pred_check_branch
      %59 = sbr.rel (0) target = $region25
    $region24: #{tpu_custom_call.1} parent=1 // pred_region
      %61 = vsyncadd [#allocation10], 0
      %s62 = sshll.u32 %s5, 4
      %s63 = int_to_ptr.hbm [resolvable:$true] %s62
      %s64 = sshll.u32 [#allocation9], 4
      %s65 = int_to_ptr.vmem [resolvable:$true] %s64
      %70 = dma.hbm_to_vmem [thread:$0]  %s63, 1024, %s65, [#allocation10], 64, 64, 4
    $region25: #{tpu_custom_call.1} parent=1 // pred_fallthru
      _
    // Predicated region
    $region26: #{tpu_custom_call.1} parent=1 // pred_check
      _
    $region27: #{tpu_custom_call.1} parent=1 // pred_check_branch
      %72 = sbr.rel (0) target = $region29
    $region28: #{tpu_custom_call.1} parent=1 // pred_region
      _
    $region29: #{tpu_custom_call.1} parent=1 // pred_fallthru
      _
    // Predicated region
    $region30: #{tpu_custom_call.1} parent=1 // pred_check
      _
    $region31: #{tpu_custom_call.1} parent=1 // pred_check_branch
      %74 = sbr.rel (0) target = $region33
    $region32: #{tpu_custom_call.1} parent=1 // pred_region
      %76 = dma.done [#allocation4], 128
    $region33: #{tpu_custom_call.1} parent=1 // pred_fallthru
      _
    // Predicated region
    $region34: #{tpu_custom_call.1} parent=1 // pred_check
      _
    $region35: #{tpu_custom_call.1} parent=1 // pred_check_branch
      %78 = sbr.rel (0) target = $region37
    $region36: #{tpu_custom_call.1} parent=1 // pred_region
      %80 = dma.done [#allocation7], 192
    $region37: #{tpu_custom_call.1} parent=1 // pred_fallthru
      _
    // Predicated region
    $region38: #{tpu_custom_call.1} parent=1 // pred_check
      _
    $region39: #{tpu_custom_call.1} parent=1 // pred_check_branch
      %82 = sbr.rel (0) target = $region41
    $region40: #{tpu_custom_call.1} parent=1 // pred_region
      %84 = dma.done [#allocation7], 1024
    $region41: #{tpu_custom_call.1} parent=1 // pred_fallthru
      _
    // Predicated region
    $region42: #{tpu_custom_call.1} parent=1 // pred_check
      _
    $region43: #{tpu_custom_call.1} parent=1 // pred_check_branch
      %86 = sbr.rel (0) target = $region45
    $region44: #{tpu_custom_call.1} parent=1 // pred_region
      %88 = dma.done [#allocation10], 1024
    $region45: #{tpu_custom_call.1} parent=1 // pred_fallthru
      _
    %v90 = vld [vmem:[#allocation3] sm:$0xff]
    %v91 = vpack.c.bf16 %v90, %v90
    %v92 = vld [vmem:[#allocation6] sm:$0xf]
    %v93 = vld [vmem:[#allocation6 + $0x4] sm:$0xf]
    %v94 = vld [vmem:[#allocation6 + $0x8] sm:$0x3]
    %v95 = vld [vmem:[%s2] sm:$0x1]
    %v97 = vperm.slane %v95, 0
    %v102 = vunpack.c.l.b16 %v92
    %v103 = vunpack.c.l.b16 %v93
    %v104 = vunpack.c.l.b16 %v94
    %v105 = vpack.c.b16 %v103, %v102
    %v106 = vpack.c.b16 %v104, %v104
    %vm108 = vcmask 162816
    %v110 = vsel %vm108, %v91, 0
    %vm112 = vcmask 1041408
    %v114 = vsel %vm112, %v106, 0
    %116 = vmatpush.bf16.msra.mxu0 0
    %117 = vmatpush.bf16.msra.mxu0 0
    %118 = vmatpush.bf16.msra.mxu0 0
    %119 = vmatpush.bf16.msra.mxu0 0
    %120 = vmatpush.bf16.msra.mxu0 0
    %121 = vmatpush.bf16.msra.mxu0 0
    %122 = vmatpush.bf16.msra.mxu0 %v114
    %123 = vmatpush.bf16.msra.mxu0 %v105
    %124 = vmatmul.bf16.gmra.mxu0 %v110
    %v125 = vpop.f32.mrf.mxu0
    %v126 = vadd.f32 %v97, %v125
    %v127 = vpop.f32.mrf.mxu0
    %128 = vdwg.mxu0
    %v129 = vmax.f32 %v126, 0.0
    %v130 = vrot.slane %v129, 4
    %v131 = vadd.f32 %v129, %v130
    %v132 = vrot.slane %v131, 2
    %v133 = vadd.f32 %v131, %v132
    %v134 = vrot.slane %v133, 1
    %v135 = vadd.f32 %v133, %v134
    %v136 = vmul.f32 %v135, 0.125
    %v137 = vmul.f32 %v129, %v129
    %v138 = vrot.slane %v137, 4
    %v139 = vadd.f32 %v137, %v138
    %v140 = vrot.slane %v139, 2
    %v141 = vadd.f32 %v139, %v140
    %v142 = vrot.slane %v141, 1
    %v143 = vadd.f32 %v141, %v142
    %v144 = vmul.f32 %v143, 0.125
    %v145 = vmul.f32 %v136, %v136
    %v146 = vsub.f32 %v144, %v145
    %v147 = vmax.f32 %v146, 0.0
    %v148 = vadd.f32 %v147, 1e-05
    %v149 = vrsqrt.pop %v148
    %v150 = vmul.f32 %v149, %v148
    %v151 = vmul.f32 %v150, %v149
    %v152 = vmul.f32 0.5, %v151
    %v153 = vsub.f32 1.5, %v152
    %v154 = vmul.f32 %v149, %v153
    %vm155 = vweird.f32 %v148
    %vm156 = vweird.f32 %v149
    %vm157 = vmor %vm155, %vm156
    %v158 = vsel %vm157, %v149, %v154
    %v159 = vsub.f32 %v129, %v136
    %v160 = vmul.f32 %v159, %v158
    %v161 = vpack.c.bf16 %v160, %v160
    %v162 = vld [vmem:[#allocation8] sm:$0xf]
    %v163 = vld [vmem:[#allocation8 + $0x4] sm:$0xf]
    %v164 = vld [vmem:[#allocation8 + $0x8] sm:$0xf]
    %v165 = vld [vmem:[#allocation8 + $0xc] sm:$0xf]
    %v166 = vld [vmem:[#allocation8 + $0x10] sm:$0xf]
    %v167 = vld [vmem:[#allocation8 + $0x14] sm:$0xf]
    %v168 = vld [vmem:[#allocation8 + $0x18] sm:$0xf]
    %v169 = vld [vmem:[#allocation8 + $0x1c] sm:$0xf]
    %v170 = vld [vmem:[#allocation8 + $0x20] sm:$0xf]
    %v171 = vld [vmem:[#allocation8 + $0x24] sm:$0xf]
    %v172 = vld [vmem:[#allocation8 + $0x28] sm:$0xf]
    %v173 = vld [vmem:[#allocation8 + $0x2c] sm:$0xf]
    %v174 = vld [vmem:[#allocation8 + $0x30] sm:$0xf]
    %v175 = vld [vmem:[#allocation8 + $0x34] sm:$0xf]
    %v176 = vld [vmem:[#allocation8 + $0x38] sm:$0xf]
    %v177 = vld [vmem:[#allocation8 + $0x3c] sm:$0xf]
    %v178 = vld [vmem:[%s4] sm:$0x1]
    %v180 = vperm.slane %v178, 0
    %v198 = vunpack.c.l.b16 %v162
    %v199 = vunpack.c.l.b16 %v163
    %v200 = vunpack.c.l.b16 %v164
    %v201 = vunpack.c.l.b16 %v165
    %v202 = vunpack.c.l.b16 %v166
    %v203 = vunpack.c.l.b16 %v167
    %v204 = vunpack.c.l.b16 %v168
    %v205 = vunpack.c.l.b16 %v169
    %v206 = vunpack.c.l.b16 %v170
    %v207 = vunpack.c.l.b16 %v171
    %v208 = vunpack.c.l.b16 %v172
    %v209 = vunpack.c.l.b16 %v173
    %v210 = vunpack.c.l.b16 %v174
    %v211 = vunpack.c.l.b16 %v175
    %v212 = vunpack.c.l.b16 %v176
    %v213 = vunpack.c.l.b16 %v177
    %v214 = vpack.c.b16 %v199, %v198
    %v215 = vpack.c.b16 %v201, %v200
    %v216 = vpack.c.b16 %v203, %v202
    %v217 = vpack.c.b16 %v205, %v204
    %v218 = vpack.c.b16 %v207, %v206
    %v219 = vpack.c.b16 %v209, %v208
    %v220 = vpack.c.b16 %v211, %v210
    %v221 = vpack.c.b16 %v213, %v212
    %230 = vmatpush.bf16.msra.mxu0 %v221
    %231 = vmatpush.bf16.msra.mxu0 %v220
    %232 = vmatpush.bf16.msra.mxu0 %v219
    %233 = vmatpush.bf16.msra.mxu0 %v218
    %234 = vmatpush.bf16.msra.mxu0 %v217
    %235 = vmatpush.bf16.msra.mxu0 %v216
    %236 = vmatpush.bf16.msra.mxu0 %v215
    %237 = vmatpush.bf16.msra.mxu0 %v214
    %238 = vmatmul.bf16.gmra.mxu0 %v161
    %v239 = vpop.f32.mrf.mxu0
    %v240 = vadd.f32 %v180, %v239
    %v241 = vpop.f32.mrf.mxu0
    %242 = vdwg.mxu0
    %v243 = vmax.f32 %v240, 0.0
    %v244 = vpack.c.bf16 %v243, %v243
    %v245 = vld [vmem:[#allocation9] sm:$0xf]
    %v246 = vld [vmem:[#allocation9 + $0x4] sm:$0xf]
    %v247 = vld [vmem:[#allocation9 + $0x8] sm:$0xf]
    %v248 = vld [vmem:[#allocation9 + $0xc] sm:$0xf]
    %v249 = vld [vmem:[#allocation9 + $0x10] sm:$0xf]
    %v250 = vld [vmem:[#allocation9 + $0x14] sm:$0xf]
    %v251 = vld [vmem:[#allocation9 + $0x18] sm:$0xf]
    %v252 = vld [vmem:[#allocation9 + $0x1c] sm:$0xf]
    %v253 = vld [vmem:[#allocation9 + $0x20] sm:$0xf]
    %v254 = vld [vmem:[#allocation9 + $0x24] sm:$0xf]
    %v255 = vld [vmem:[#allocation9 + $0x28] sm:$0xf]
    %v256 = vld [vmem:[#allocation9 + $0x2c] sm:$0xf]
    %v257 = vld [vmem:[#allocation9 + $0x30] sm:$0xf]
    %v258 = vld [vmem:[#allocation9 + $0x34] sm:$0xf]
    %v259 = vld [vmem:[#allocation9 + $0x38] sm:$0xf]
    %v260 = vld [vmem:[#allocation9 + $0x3c] sm:$0xf]
    %s261 = sld [smem:[#allocation2]]
    %v262 = vstv %s261
    %v279 = vunpack.c.l.b16 %v245
    %v280 = vunpack.c.l.b16 %v246
    %v281 = vunpack.c.l.b16 %v247
    %v282 = vunpack.c.l.b16 %v248
    %v283 = vunpack.c.l.b16 %v249
    %v284 = vunpack.c.l.b16 %v250
    %v285 = vunpack.c.l.b16 %v251
    %v286 = vunpack.c.l.b16 %v252
    %v287 = vunpack.c.l.b16 %v253
    %v288 = vunpack.c.l.b16 %v254
    %v289 = vunpack.c.l.b16 %v255
    %v290 = vunpack.c.l.b16 %v256
    %v291 = vunpack.c.l.b16 %v257
    %v292 = vunpack.c.l.b16 %v258
    %v293 = vunpack.c.l.b16 %v259
    %v294 = vunpack.c.l.b16 %v260
    %v295 = vpack.c.b16 %v280, %v279
    %v296 = vpack.c.b16 %v282, %v281
    %v297 = vpack.c.b16 %v284, %v283
    %v298 = vpack.c.b16 %v286, %v285
    %v299 = vpack.c.b16 %v288, %v287
    %v300 = vpack.c.b16 %v290, %v289
    %v301 = vpack.c.b16 %v292, %v291
    %v302 = vpack.c.b16 %v294, %v293
    %311 = vmatpush.bf16.msra.mxu0 %v302
    %312 = vmatpush.bf16.msra.mxu0 %v301
    %313 = vmatpush.bf16.msra.mxu0 %v300
    %314 = vmatpush.bf16.msra.mxu0 %v299
    %315 = vmatpush.bf16.msra.mxu0 %v298
    %316 = vmatpush.bf16.msra.mxu0 %v297
    %317 = vmatpush.bf16.msra.mxu0 %v296
    %318 = vmatpush.bf16.msra.mxu0 %v295
    %319 = vmatmul.bf16.gmra.mxu0 %v244
    %v320 = vpop.f32.mrf.mxu0
    %v321 = vadd.f32 %v262, %v320
    %v322 = vpop.f32.mrf.mxu0
    %323 = vdwg.mxu0
    %324 = vst [vmem:[#allocation11] sm:$0xff] %v321
    // Predicated region
    $region46: #{tpu_custom_call.1} parent=1 // pred_check
      _
    $region47: #{tpu_custom_call.1} parent=1 // pred_check_branch
      %326 = sbr.rel (0) target = $region49
    $region48: #{tpu_custom_call.1} parent=1 // pred_region
      %328 = vsyncadd [#allocation5], 0
      %s330 = sshll.u32 [#allocation11], 4
      %s331 = int_to_ptr.vmem [resolvable:$true] %s330
      %s332 = sshll.u32 %s7, 4
      %s333 = int_to_ptr.hbm [resolvable:$true] %s332
      %335 = dma.vmem_to_hbm [thread:$0]  %s331, 128, %s333, [#allocation5]
    $region49: #{tpu_custom_call.1} parent=1 // pred_fallthru
      _
    // Predicated region
    $region50: #{tpu_custom_call.1} parent=1 // pred_check
      _
    $region51: #{tpu_custom_call.1} parent=1 // pred_check_branch
      %337 = sbr.rel (0) target = $region53
    $region52: #{tpu_custom_call.1} parent=1 // pred_region
      %339 = dma.done [#allocation5], 128
    $region53: #{tpu_custom_call.1} parent=1 // pred_fallthru
      _
    %340 = vsyncpa [#allocation4], 1
    %341 = vsyncpa [#allocation7], 1
    %342 = vsyncpa [#allocation10], 1
    %343 = vsyncpa [#allocation5], 1

</llo_original>
